<compile_context>
chip_gen: v5e
topology: v5e:2x2
jax: 0.10.0
libtpu: 0.0.40
codegen_flags: <defaults>
</compile_context>

<pallas_src>
import jax
import jax.numpy as jnp
from jax.experimental import pallas as pl
from jax.experimental.pallas import tpu as pltpu

_LANE = 128
_TARGET_BLOCK_BYTES = 6 * 1024 * 1024      # per block buffer (input or output)
_MIN_SPLIT_BYTES = 256 * 1024              # below this, a single block is fine
_VMEM_LIMIT_BYTES = 40 * 1024 * 1024       # 4 x 6 MiB double-buffered << 40 MiB


def _normalize_p(p):
    """Integral float exponents (e.g. 3.0) behave like ints in torch."""
    if isinstance(p, bool):
        return int(p)
    if isinstance(p, float) and float(p).is_integer():
        return int(p)
    return p


def _int_pow(x, e):
    """Square-and-multiply for e >= 1 (log2(e)+popcount(e) multiplies, exact)."""
    result = None
    base = x
    while e > 0:
        if e & 1:
            result = base if result is None else result * base
        e >>= 1
        if e:
            base = base * base
    return result


def _apply_pow(x, p, compute_dtype, out_dtype):
    """Shared math for the kernel body and the tiny ragged-tail fallback."""
    xf = x.astype(compute_dtype)
    if isinstance(p, int):
        if p == 0:
            y = jnp.ones_like(xf)
        else:
            y = _int_pow(xf, abs(p))
            if p < 0:
                y = 1.0 / y  # no ones_like broadcast; EUP/VALU slack is free here
    else:
        # Fractional exponent -> exp(p*log(x)) on the EUP (NaN for x<0, like torch).
        y = jnp.power(xf, jnp.asarray(p, dtype=compute_dtype))
    return y.astype(out_dtype)


def _power_kernel(x_ref, o_ref, *, p, compute_dtype):
    o_ref[...] = _apply_pow(x_ref[...], p, compute_dtype, o_ref.dtype)


def _choose_block_rows(rows, sublane, itemsize, lane):
    row_bytes = lane * itemsize
    total_bytes = rows * row_bytes
    # Tiny arrays: one block (full-dim block shape is always legal).
    if total_bytes <= _MIN_SPLIT_BYTES or rows <= sublane:
        return rows
    # Cap at ~6 MiB per block buffer, but always split into >= 4 blocks so the
    # "parallel" grid axis shards across v7x's two TensorCores and the pipeline
    # overlaps DMA with compute.
    target_rows = max(sublane, (_TARGET_BLOCK_BYTES // row_bytes) // sublane * sublane)
    quarter_rows = max(sublane, pl.cdiv(pl.cdiv(rows, 4), sublane) * sublane)
    return min(target_rows, quarter_rows)


def _power_2d(x2d, p, compute_dtype):
    rows, lane = x2d.shape
    dtype = x2d.dtype
    itemsize = jnp.dtype(dtype).itemsize
    # Sub-32-bit dtypes pack along sublanes: 8 rows f32, 16 bf16, 32 int8.
    sublane = max(8, 32 // itemsize)

    block_rows = _choose_block_rows(rows, sublane, itemsize, lane)
    grid = (pl.cdiv(rows, block_rows),)

    # Advisory cost estimate so XLA schedules around the mem-bound custom call.
    n = rows * lane
    if isinstance(p, int):
        ap = abs(p)
        mults = (max(ap.bit_length() - 1, 0) + max(bin(ap).count("1") - 1, 0)) if ap else 0
        flops = (mults + (1 if p < 0 else 0)) * n
        transcendentals = 0
    else:
        flops = n
        transcendentals = 2 * n
    cost = pl.CostEstimate(
        flops=max(flops, 1),
        transcendentals=transcendentals,
        bytes_accessed=2 * n * itemsize,
    )

    kernel = lambda x_ref, o_ref: _power_kernel(x_ref, o_ref, p=p, compute_dtype=compute_dtype)

    return pl.pallas_call(
        kernel,
        out_shape=jax.ShapeDtypeStruct((rows, lane), dtype),
        grid_spec=pltpu.PrefetchScalarGridSpec(
            num_scalar_prefetch=0,
            grid=grid,
            in_specs=[pl.BlockSpec((block_rows, lane), lambda i: (i, 0))],
            out_specs=pl.BlockSpec((block_rows, lane), lambda i: (i, 0)),
        ),
        compiler_params=pltpu.CompilerParams(
            dimension_semantics=("parallel",),        # megacore sharding on v7x
            vmem_limit_bytes=_VMEM_LIMIT_BYTES,       # 6 MiB blocks legal on v5e too
        ),
        cost_estimate=cost,
    )(x2d)


def power_pallas(x, p):
    """Compute x ** p with a Pallas TPU kernel. Matches torch `x ** p`."""
    p = _normalize_p(p)
    x = jnp.asarray(x)
    orig_shape = x.shape
    dtype = x.dtype
    n = x.size

    # torch opmath: half/bfloat16 pow is computed in float32.
    compute_dtype = jnp.float32 if jnp.issubdtype(dtype, jnp.floating) else dtype

    # Trivial exponents: skip the HBM round trip entirely.
    if isinstance(p, int) and p == 0:
        return jnp.ones(orig_shape, dtype=dtype)
    if isinstance(p, int) and p == 1:
        return x

    if n == 0:
        return x

    rem = n % _LANE
    x_flat = x.reshape(-1)

    if rem == 0:
        # Common path: zero-copy lane-dense view, no padding, no re-slicing.
        out2d = _power_2d(x_flat.reshape(-1, _LANE), p, compute_dtype)
        return out2d.reshape(orig_shape)

    if n < _LANE:
        # Sub-vreg input: not worth a kernel launch; tiny jnp op instead.
        return _apply_pow(x_flat, p, compute_dtype, dtype).reshape(orig_shape)

    # Unaligned path: run the kernel on the 128-aligned head and compute the
    # <=127-element ragged tail with a tiny jnp op (avoids the full-array
    # pad-with-ones + slice round trip of the previous version).
    head_n = n - rem
    head_out = _power_2d(x_flat[:head_n].reshape(-1, _LANE), p, compute_dtype).reshape(-1)
    tail_out = _apply_pow(x_flat[head_n:], p, compute_dtype, dtype)
    return jnp.concatenate([head_out, tail_out]).reshape(orig_shape)


if __name__ == "__main__":
    p = 3  # exponent for the Power module
    key = jax.random.PRNGKey(0)
    x = jax.random.normal(key, (2, 4, 16, 16), dtype=jnp.float32)

    y = power_pallas(x, p)
    jax.block_until_ready(y)

    # Reference check against plain JAX (same semantics as torch x ** p).
    y_ref = x ** p
    assert y.shape == x.shape and y.dtype == x.dtype
    assert jnp.allclose(y, y_ref, rtol=1e-6, atol=1e-6)

    # Also exercise the unaligned (head + ragged tail) path.
    x2 = jax.random.normal(jax.random.PRNGKey(1), (3, 5, 17), dtype=jnp.float32)
    y2 = power_pallas(x2, p)
    jax.block_until_ready(y2)
    assert y2.shape == x2.shape and y2.dtype == x2.dtype
    assert jnp.allclose(y2, x2 ** p, rtol=1e-6, atol=1e-6)

    print("KERNEL_OK")
</pallas_src>

<mosaic_0001>
module attributes {stable_mosaic.version = 11 : i64} {
  func.func @_lambda_(%arg0: i32, %arg1: memref<16x128xf32, #tpu.memory_space<vmem>>, %arg2: memref<16x128xf32, #tpu.memory_space<vmem>>) attributes {dimension_semantics = [#tpu.dimension_semantics<parallel>], iteration_bounds = array<i64: 1>, scalar_prefetch = 0 : i64, scratch_operands = 0 : i64, tpu.core_type = #tpu.core_type<tc>, window_params = [{transform_indices = @transform_0, window_bounds = array<i64: 16, 128>}, {transform_indices = @transform_1, window_bounds = array<i64: 16, 128>}]} {
    %c0 = arith.constant 0 : index
    %c0_0 = arith.constant 0 : index
    %0 = vector.load %arg1[%c0, %c0_0] : memref<16x128xf32, #tpu.memory_space<vmem>>, vector<16x128xf32>
    %1 = arith.mulf %0, %0 : vector<16x128xf32>
    %2 = arith.mulf %0, %1 : vector<16x128xf32>
    %c0_1 = arith.constant 0 : index
    %c0_2 = arith.constant 0 : index
    %3 = vector.load %arg2[%c0_1, %c0_2] : memref<16x128xf32, #tpu.memory_space<vmem>>, vector<16x128xf32>
    tpu.vector_store %arg2[%c0_1, %c0_2], %2 {strides = array<i32>} : memref<16x128xf32, #tpu.memory_space<vmem>>, vector<16x128xf32>,
    return
  }
  func.func @transform_0(%arg0: i32) -> (i32, i32) {
    %c0_i32 = arith.constant 0 : i32
    %c0_i32_0 = arith.constant 0 : i32
    return %arg0, %c0_i32 : i32, i32
  }
  func.func @transform_1(%arg0: i32) -> (i32, i32) {
    %c0_i32 = arith.constant 0 : i32
    %c0_i32_0 = arith.constant 0 : i32
    return %arg0, %c0_i32 : i32, i32
  }
}

</mosaic_0001>

<llo_original>
// kernel: tpu_custom_call.1
$region0: #{tpu_custom_call.1}
  #allocation0 [shape = 'u32[]', space=smem, size = 0x4, offset = 0x4, fixed_abs, tag = 'smem constant byte address 0x4 - core index']
  #allocation1 [shape = 'u32[72,128]{1,0:T(1,128)}', space=vmem, size = 0x9000, scoped, tag = 'internal scratch']
  %s0 = inlined_call_operand.hbm [shape: f32[16,128], index: 0, kind: input, shape index: {}]
  %s1 = inlined_call_operand.hbm [shape: f32[16,128], index: 1, kind: output, shape index: {}]
  %s2 = sld [smem:[#allocation0]]
  $region18: #{tpu_custom_call.1} parent=0
    _
  %s4 = ssub.s32 1, %s2
  %s5 = scalar_select 0, %s4, %s2
  $region1: #{tpu_custom_call.1} parent=0
    #allocation2 [shape = 'u8[8192]{0}', space=vmem, size = 0x2000, scoped, tag = 'input window, operand 0, single buffered']
    #allocation3 [shape = 's32[1]{0}', space=sflag, size = 0x4, scoped, tag = 'scoped memory for tpu_custom_call.1']
    #allocation4 [shape = 's32[1]{0}', space=sflag, size = 0x4, scoped, tag = 'scoped memory for tpu_custom_call.1']
    #allocation5 [shape = 'u8[8192]{0}', space=vmem, size = 0x2000, scoped, tag = 'output window, operand 0, single buffered']
    %6 = vsyncpa [#allocation3], 0
    %7 = vsyncpa [#allocation4], 0
    // Predicated region
    $region2: #{tpu_custom_call.1} parent=1 // pred_check
      _
    $region3: #{tpu_custom_call.1} parent=1 // pred_check_branch
      %9 = sbr.rel (0) target = $region5
    $region4: #{tpu_custom_call.1} parent=1 // pred_region
      %11 = vsyncadd [#allocation3], 0
      %s12 = sshll.u32 %s0, 4
      %s13 = int_to_ptr.hbm [resolvable:$true] %s12
      %s14 = sshll.u32 [#allocation2], 4
      %s15 = int_to_ptr.vmem [resolvable:$true] %s14
      %20 = dma.hbm_to_vmem [thread:$0]  %s13, 256, %s15, [#allocation3], 128, 128, 8
    $region5: #{tpu_custom_call.1} parent=1 // pred_fallthru
      _
    // Predicated region
    $region6: #{tpu_custom_call.1} parent=1 // pred_check
      _
    $region7: #{tpu_custom_call.1} parent=1 // pred_check_branch
      %22 = sbr.rel (0) target = $region9
    $region8: #{tpu_custom_call.1} parent=1 // pred_region
      %24 = dma.done [#allocation3], 256
    $region9: #{tpu_custom_call.1} parent=1 // pred_fallthru
      _
    %v25 = vld [vmem:[#allocation2] sm:$0xff]
    %v26 = vld [vmem:[#allocation2 + $0x8] sm:$0xff]
    %v27 = vmul.f32 %v25, %v25
    %v28 = vmul.f32 %v26, %v26
    %v29 = vmul.f32 %v25, %v27
    %v30 = vmul.f32 %v26, %v28
    %31 = vst [vmem:[#allocation5] sm:$0xff] %v29
    %32 = vst [vmem:[#allocation5 + $0x8] sm:$0xff] %v30
    // Predicated region
    $region10: #{tpu_custom_call.1} parent=1 // pred_check
      _
    $region11: #{tpu_custom_call.1} parent=1 // pred_check_branch
      %34 = sbr.rel (0) target = $region13
    $region12: #{tpu_custom_call.1} parent=1 // pred_region
      %36 = vsyncadd [#allocation4], 0
      %s37 = sshll.u32 [#allocation5], 4
      %s38 = int_to_ptr.vmem [resolvable:$true] %s37
      %s39 = sshll.u32 %s1, 4
      %s40 = int_to_ptr.hbm [resolvable:$true] %s39
      %45 = dma.vmem_to_hbm [thread:$0]  %s38, 256, %s40, [#allocation4], 128, 128, 8
    $region13: #{tpu_custom_call.1} parent=1 // pred_fallthru
      _
    // Predicated region
    $region14: #{tpu_custom_call.1} parent=1 // pred_check
      _
    $region15: #{tpu_custom_call.1} parent=1 // pred_check_branch
      %47 = sbr.rel (0) target = $region17
    $region16: #{tpu_custom_call.1} parent=1 // pred_region
      %49 = dma.done [#allocation4], 256
    $region17: #{tpu_custom_call.1} parent=1 // pred_fallthru
      _
    %50 = vsyncpa [#allocation3], 1
    %51 = vsyncpa [#allocation4], 1

</llo_original>
